<compile_context>
chip_gen: v7x
topology: tpu7x:2x2x1
jax: 0.10.0
libtpu: 0.0.40
codegen_flags: <defaults>
</compile_context>

<pallas_src>
import jax
import jax.numpy as jnp
from jax.experimental import pallas as pl
from jax.experimental.pallas import tpu as pltpu


def _gim_kernel(sig_ref, pos_ref, neg_ref, wb_ref, alpha_ref, b2_ref, out_ref):
    """One batch block.

    sig/pos/neg: (Bt, T, D)  VMEM
    wb_ref:      (3, H, 1)   VMEM  rows = [w1 / T, b1, w2], sublane-major columns
    alpha_ref:   (1, W)      VMEM  PReLU weight tiled to the lane layout
    b2_ref:      (1, 1)      SMEM  final Conv1d bias
    out_ref:     (1, 1, W)   VMEM  [pos rows | neg rows], W = 2 * Bt * L
    """
    bt = sig_ref.shape[0]

    # ---- make_samples: time reduction (the 1/T is folded into w1) ------------
    s_sig = jnp.sum(sig_ref[...], axis=1)            # (Bt, D)
    s_pos = jnp.sum(pos_ref[...], axis=1)            # (Bt, D)
    s_neg = jnp.sum(neg_ref[...], axis=1)            # (Bt, D)

    # Lane-dense sample row:
    #   [sig_0|pos_0|sig_1|pos_1|...|sig_0|neg_0|sig_1|neg_1|...]   -> (1, W)
    # built with static row slices + one lane concat (no tiled-dim reshapes).
    parts = []
    for b in range(bt):
        parts.append(s_sig[b:b + 1, :])
        parts.append(s_pos[b:b + 1, :])
    for b in range(bt):
        parts.append(s_sig[b:b + 1, :])
        parts.append(s_neg[b:b + 1, :])
    x_row = jnp.concatenate(parts, axis=1)            # (1, W)

    w1 = wb_ref[0]                                    # (H, 1)  (already / T)
    b1 = wb_ref[1]                                    # (H, 1)
    w2 = wb_ref[2]                                    # (H, 1)
    alpha = alpha_ref[...]                            # (1, W)

    # Conv1d(1 -> H, k=1):  h[o, p] = w1[o] * x[p] + b1[o]            -> (H, W)
    h = w1 * x_row + b1
    # PReLU applied along the spatial axis (per-lane weight, see layout note).
    h = jnp.where(h >= 0.0, h, alpha * h)
    # Conv1d(H -> 1, k=1): weighted reduce over the H sublane axis + bias.
    out_ref[0] = jnp.sum(w2 * h, axis=0, keepdims=True) + b2_ref[0, 0]   # (1, W)


def _pick_block_b(B, T, D, max_block_b=8, vmem_budget_bytes=8 << 20):
    """Largest divisor of B (<= max_block_b) whose per-step working set fits a
    conservative VMEM budget (safe vs v5e 16 MiB / v6e-v7x 32 MiB scoped)."""
    L = 2 * D
    H = L
    best = 1
    for bt in range(1, min(B, max_block_b) + 1):
        if B % bt:
            continue
        W = 2 * bt * L
        emb = 3 * bt * T * D * 4 * 2           # three input blocks, double-buffered
        interm = 3 * H * W * 4                 # (H, W) intermediates (generous)
        small = 4 * (3 * H + 3 * W)            # params + alpha + output row
        if emb + interm + small <= vmem_budget_bytes:
            best = bt
    return best


def gim_worker_forward(embedding_sig, embedding_pos, embedding_neg, params,
                       *, block_b=None):
    """GIMWorker forward pass.  Returns (2B, 1, 2D) float32."""
    w1, b1, alpha, w2, b2 = params
    B, T, D = embedding_sig.shape
    L = 2 * D
    H = w1.reshape(-1).shape[0]
    # Constraint imposed by the reference PyTorch module (PReLU weight applied
    # along the spatial axis after transpose(1, -1)).
    assert H == L and alpha.reshape(-1).shape[0] == L, "need hidden_channels == 2*emb_dim"

    if block_b is None:
        block_b = _pick_block_b(B, T, D)
    assert B % block_b == 0, "block_b must divide the batch"
    nb = B // block_b
    W = 2 * block_b * L

    f32 = jnp.float32
    inv_T = f32(1.0 / T)
    # Sublane-major parameter columns in ONE (3, H, 1) input; 1/T folded into w1.
    wb = jnp.stack([w1.reshape(H, 1).astype(f32) * inv_T,
                    b1.reshape(H, 1).astype(f32),
                    w2.reshape(H, 1).astype(f32)], axis=0)                  # (3, H, 1)
    # PReLU weight pre-tiled to the lane-dense [pos rows | neg rows] layout.
    alpha_t = jnp.tile(alpha.reshape(1, L).astype(f32), (1, 2 * block_b))   # (1, W)
    b2_s = b2.reshape(1, 1).astype(f32)                                     # (1, 1)

    emb_spec = pl.BlockSpec((block_b, T, D), lambda i: (i, 0, 0))
    out = pl.pallas_call(
        _gim_kernel,
        out_shape=jax.ShapeDtypeStruct((nb, 1, W), f32),
        grid=(nb,),
        in_specs=[
            emb_spec, emb_spec, emb_spec,
            pl.BlockSpec((3, H, 1), lambda i: (0, 0, 0)),        # w1 / b1 / w2
            pl.BlockSpec((1, W), lambda i: (0, 0)),              # tiled PReLU weight
            pl.BlockSpec(memory_space=pltpu.MemorySpace.SMEM),   # b2 scalar
        ],
        out_specs=pl.BlockSpec((1, 1, W), lambda i: (i, 0, 0)),
        compiler_params=pltpu.CompilerParams(
            dimension_semantics=("parallel",)),
    )(embedding_sig.astype(f32), embedding_pos.astype(f32),
      embedding_neg.astype(f32), wb, alpha_t, b2_s)

    # (nb, 1, W) -> (2B, 1, L): pure layout plumbing, outside the kernel.
    out = out.reshape(nb, 2, block_b, L)
    out = jnp.transpose(out, (1, 0, 2, 3)).reshape(2 * B, 1, L)
    return out


def init_params(key, emb_dim=16):
    """Deterministic synthetic parameters matching GIMWorker(in_channels=1,
    hidden_blocks=1, hidden_channels=2*emb_dim, hidden_kernel_size=1)."""
    H = 2 * emb_dim                      # hidden_channels (== L, required)
    L = 2 * emb_dim
    k1, k2, k3, k4 = jax.random.split(key, 4)
    # Conv1d(1 -> H, k=1): PyTorch default init bound = 1/sqrt(in_ch * k) = 1.
    w1 = jax.random.uniform(k1, (1, H), jnp.float32, minval=-1.0, maxval=1.0)
    b1 = jax.random.uniform(k2, (1, H), jnp.float32, minval=-1.0, maxval=1.0)
    # PReLU default init is 0.25; add a small ramp so the per-position weight matters.
    alpha = (0.25 + 0.01 * jnp.arange(L, dtype=jnp.float32) / L).reshape(1, L)
    # Conv1d(H -> 1, k=1): bound = 1/sqrt(H).
    bnd = 1.0 / jnp.sqrt(jnp.float32(H))
    w2 = jax.random.uniform(k3, (1, H), jnp.float32, minval=-bnd, maxval=bnd)
    b2 = jax.random.uniform(k4, (1, 1), jnp.float32, minval=-bnd, maxval=bnd)
    return w1, b1, alpha, w2, b2


def _reference_forward(sig, pos, neg, params):
    """Pure-jnp reference (mirrors the PyTorch forward) for verification."""
    w1, b1, alpha, w2, b2 = params
    w1, b1, alpha, w2 = (a.reshape(-1) for a in (w1, b1, alpha, w2))
    x_pos = jnp.concatenate([sig, pos], axis=2).mean(axis=1)[:, None, :]
    x_neg = jnp.concatenate([sig, neg], axis=2).mean(axis=1)[:, None, :]
    x = jnp.concatenate([x_pos, x_neg], axis=0)                  # (N, 1, L)
    h = x * w1[None, :, None] + b1[None, :, None]                # (N, H, L)
    h_t = jnp.swapaxes(h, 1, -1)                                 # transpose(1, -1)
    h_t = jnp.where(h_t >= 0, h_t, alpha[None, :, None] * h_t)   # PReLU on dim 1
    h = jnp.swapaxes(h_t, 1, -1)
    out = jnp.einsum("nhl,h->nl", h, w2) + b2[0, 0]
    return out[:, None, :]


if __name__ == "__main__":
    def _run(B, T, D):
        key = jax.random.PRNGKey(0)
        k_sig, k_pos, k_neg, k_par = jax.random.split(key, 4)
        sig = jax.random.normal(k_sig, (B, T, D), jnp.float32)
        pos = jax.random.normal(k_pos, (B, T, D), jnp.float32)
        neg = jax.random.normal(k_neg, (B, T, D), jnp.float32)
        params = init_params(k_par, emb_dim=D)
        out = jax.block_until_ready(gim_worker_forward(sig, pos, neg, params))
        ref = _reference_forward(sig, pos, neg, params)
        assert out.shape == (2 * B, 1, 2 * D), out.shape
        assert jnp.allclose(out, ref, atol=1e-5, rtol=1e-5), \
            f"mismatch vs reference at B={B}, T={T}, D={D}"

    _run(B=2, T=8, D=16)     # toy spec shape (single grid step, W = 128 lanes)
    _run(B=16, T=8, D=16)    # multi-step batch grid (block_b=8, nb=2)
    print("KERNEL_OK")
</pallas_src>

<mosaic_0001>
module attributes {stable_mosaic.version = 11 : i64} {
  func.func @_gim_kernel(%arg0: i32, %arg1: memref<2x8x16xf32, #tpu.memory_space<vmem>>, %arg2: memref<2x8x16xf32, #tpu.memory_space<vmem>>, %arg3: memref<2x8x16xf32, #tpu.memory_space<vmem>>, %arg4: memref<3x32x1xf32, #tpu.memory_space<vmem>>, %arg5: memref<1x128xf32, #tpu.memory_space<vmem>>, %arg6: memref<1x1xf32, #tpu.memory_space<smem>>, %arg7: memref<1x1x128xf32, #tpu.memory_space<vmem>>) attributes {dimension_semantics = [#tpu.dimension_semantics<parallel>], iteration_bounds = array<i64: 1>, scalar_prefetch = 0 : i64, scratch_operands = 0 : i64, tpu.core_type = #tpu.core_type<tc>, window_params = [{transform_indices = @transform_0, window_bounds = array<i64: 2, 8, 16>}, {transform_indices = @transform_1, window_bounds = array<i64: 2, 8, 16>}, {transform_indices = @transform_2, window_bounds = array<i64: 2, 8, 16>}, {pipeline_mode = #tpu.pipeline_mode<synchronous>, transform_indices = @transform_3, window_bounds = array<i64: 3, 32, 1>}, {pipeline_mode = #tpu.pipeline_mode<synchronous>, transform_indices = @transform_4, window_bounds = array<i64: 1, 128>}, {transform_indices = @transform_5, window_bounds = array<i64: 1, 1>}, {transform_indices = @transform_6, window_bounds = array<i64: 1, 1, 128>}]} {
    %c0 = arith.constant 0 : index
    %c0_0 = arith.constant 0 : index
    %c0_1 = arith.constant 0 : index
    %0 = vector.load %arg1[%c0, %c0_0, %c0_1] : memref<2x8x16xf32, #tpu.memory_space<vmem>>, vector<2x8x16xf32>
    %cst = arith.constant dense<0.000000e+00> : vector<2x16xf32>
    %1 = vector.multi_reduction <add>, %0, %cst [1] : vector<2x8x16xf32> to vector<2x16xf32>
    %c0_2 = arith.constant 0 : index
    %c0_3 = arith.constant 0 : index
    %c0_4 = arith.constant 0 : index
    %2 = vector.load %arg2[%c0_2, %c0_3, %c0_4] : memref<2x8x16xf32, #tpu.memory_space<vmem>>, vector<2x8x16xf32>
    %cst_5 = arith.constant dense<0.000000e+00> : vector<2x16xf32>
    %3 = vector.multi_reduction <add>, %2, %cst_5 [1] : vector<2x8x16xf32> to vector<2x16xf32>
    %c0_6 = arith.constant 0 : index
    %c0_7 = arith.constant 0 : index
    %c0_8 = arith.constant 0 : index
    %4 = vector.load %arg3[%c0_6, %c0_7, %c0_8] : memref<2x8x16xf32, #tpu.memory_space<vmem>>, vector<2x8x16xf32>
    %cst_9 = arith.constant dense<0.000000e+00> : vector<2x16xf32>
    %5 = vector.multi_reduction <add>, %4, %cst_9 [1] : vector<2x8x16xf32> to vector<2x16xf32>
    %6 = vector.extract_strided_slice %1 {offsets = [0, 0], sizes = [1, 16], strides = [1, 1]} : vector<2x16xf32> to vector<1x16xf32>
    %7 = vector.extract_strided_slice %3 {offsets = [0, 0], sizes = [1, 16], strides = [1, 1]} : vector<2x16xf32> to vector<1x16xf32>
    %8 = vector.extract_strided_slice %1 {offsets = [1, 0], sizes = [1, 16], strides = [1, 1]} : vector<2x16xf32> to vector<1x16xf32>
    %9 = vector.extract_strided_slice %3 {offsets = [1, 0], sizes = [1, 16], strides = [1, 1]} : vector<2x16xf32> to vector<1x16xf32>
    %10 = vector.extract_strided_slice %1 {offsets = [0, 0], sizes = [1, 16], strides = [1, 1]} : vector<2x16xf32> to vector<1x16xf32>
    %11 = vector.extract_strided_slice %5 {offsets = [0, 0], sizes = [1, 16], strides = [1, 1]} : vector<2x16xf32> to vector<1x16xf32>
    %12 = vector.extract_strided_slice %1 {offsets = [1, 0], sizes = [1, 16], strides = [1, 1]} : vector<2x16xf32> to vector<1x16xf32>
    %13 = vector.extract_strided_slice %5 {offsets = [1, 0], sizes = [1, 16], strides = [1, 1]} : vector<2x16xf32> to vector<1x16xf32>
    %14 = tpu.concatenate %6, %7, %8, %9, %10, %11, %12, %13 in 1 : vector<1x16xf32>, vector<1x16xf32>, vector<1x16xf32>, vector<1x16xf32>, vector<1x16xf32>, vector<1x16xf32>, vector<1x16xf32>, vector<1x16xf32> -> vector<1x128xf32>
    %c0_10 = arith.constant 0 : index
    %c0_11 = arith.constant 0 : index
    %c0_12 = arith.constant 0 : index
    %15 = vector.load %arg4[%c0_10, %c0_11, %c0_12] : memref<3x32x1xf32, #tpu.memory_space<vmem>>, vector<1x32x1xf32>
    %16 = vector.shape_cast %15 : vector<1x32x1xf32> to vector<32x1xf32>
    %c1 = arith.constant 1 : index
    %c0_13 = arith.constant 0 : index
    %c0_14 = arith.constant 0 : index
    %17 = vector.load %arg4[%c1, %c0_13, %c0_14] : memref<3x32x1xf32, #tpu.memory_space<vmem>>, vector<1x32x1xf32>
    %18 = vector.shape_cast %17 : vector<1x32x1xf32> to vector<32x1xf32>
    %c2 = arith.constant 2 : index
    %c0_15 = arith.constant 0 : index
    %c0_16 = arith.constant 0 : index
    %19 = vector.load %arg4[%c2, %c0_15, %c0_16] : memref<3x32x1xf32, #tpu.memory_space<vmem>>, vector<1x32x1xf32>
    %20 = vector.shape_cast %19 : vector<1x32x1xf32> to vector<32x1xf32>
    %c0_17 = arith.constant 0 : index
    %c0_18 = arith.constant 0 : index
    %21 = vector.load %arg5[%c0_17, %c0_18] : memref<1x128xf32, #tpu.memory_space<vmem>>, vector<1x128xf32>
    %22 = vector.broadcast %16 : vector<32x1xf32> to vector<32x128xf32>
    %23 = vector.broadcast %14 : vector<1x128xf32> to vector<32x128xf32>
    %24 = arith.mulf %22, %23 : vector<32x128xf32>
    %25 = vector.broadcast %18 : vector<32x1xf32> to vector<32x128xf32>
    %26 = arith.addf %24, %25 : vector<32x128xf32>
    %cst_19 = arith.constant 0.000000e+00 : f32
    %27 = vector.broadcast %cst_19 : f32 to vector<32x128xf32>
    %28 = arith.cmpf oge, %26, %27 : vector<32x128xf32>
    %29 = vector.broadcast %21 : vector<1x128xf32> to vector<32x128xf32>
    %30 = arith.mulf %29, %26 : vector<32x128xf32>
    %31 = arith.select %28, %26, %30 : vector<32x128xi1>, vector<32x128xf32>
    %32 = vector.broadcast %20 : vector<32x1xf32> to vector<32x128xf32>
    %33 = arith.mulf %32, %31 : vector<32x128xf32>
    %cst_20 = arith.constant dense<0.000000e+00> : vector<128xf32>
    %34 = vector.multi_reduction <add>, %33, %cst_20 [0] : vector<32x128xf32> to vector<128xf32>
    %35 = vector.shape_cast %34 : vector<128xf32> to vector<1x128xf32>
    %c0_21 = arith.constant 0 : index
    %c0_22 = arith.constant 0 : index
    %36 = memref.load %arg6[%c0_21, %c0_22] : memref<1x1xf32, #tpu.memory_space<smem>>
    %37 = vector.broadcast %36 : f32 to vector<1x128xf32>
    %38 = arith.addf %35, %37 : vector<1x128xf32>
    %c0_23 = arith.constant 0 : index
    %c0_24 = arith.constant 0 : index
    %c0_25 = arith.constant 0 : index
    %39 = vector.load %arg7[%c0_23, %c0_24, %c0_25] : memref<1x1x128xf32, #tpu.memory_space<vmem>>, vector<1x1x128xf32>
    %40 = vector.shape_cast %39 : vector<1x1x128xf32> to vector<1x128xf32>
    %41 = vector.shape_cast %38 : vector<1x128xf32> to vector<1x1x128xf32>
    tpu.vector_store %arg7[%c0_23, %c0_24, %c0_25], %41 {strides = array<i32>} : memref<1x1x128xf32, #tpu.memory_space<vmem>>, vector<1x1x128xf32>,
    return
  }
  func.func @transform_0(%arg0: i32) -> (i32, i32, i32) {
    %c0_i32 = arith.constant 0 : i32
    %c0_i32_0 = arith.constant 0 : i32
    %c0_i32_1 = arith.constant 0 : i32
    return %arg0, %c0_i32, %c0_i32_0 : i32, i32, i32
  }
  func.func @transform_1(%arg0: i32) -> (i32, i32, i32) {
    %c0_i32 = arith.constant 0 : i32
    %c0_i32_0 = arith.constant 0 : i32
    %c0_i32_1 = arith.constant 0 : i32
    return %arg0, %c0_i32, %c0_i32_0 : i32, i32, i32
  }
  func.func @transform_2(%arg0: i32) -> (i32, i32, i32) {
    %c0_i32 = arith.constant 0 : i32
    %c0_i32_0 = arith.constant 0 : i32
    %c0_i32_1 = arith.constant 0 : i32
    return %arg0, %c0_i32, %c0_i32_0 : i32, i32, i32
  }
  func.func @transform_3(%arg0: i32) -> (i32, i32, i32) {
    %c0_i32 = arith.constant 0 : i32
    %c0_i32_0 = arith.constant 0 : i32
    %c0_i32_1 = arith.constant 0 : i32
    %c0_i32_2 = arith.constant 0 : i32
    return %c0_i32, %c0_i32_0, %c0_i32_1 : i32, i32, i32
  }
  func.func @transform_4(%arg0: i32) -> (i32, i32) {
    %c0_i32 = arith.constant 0 : i32
    %c0_i32_0 = arith.constant 0 : i32
    %c0_i32_1 = arith.constant 0 : i32
    return %c0_i32, %c0_i32_0 : i32, i32
  }
  func.func @transform_5(%arg0: i32) -> (i32, i32) {
    %c0_i32 = arith.constant 0 : i32
    %c0_i32_0 = arith.constant 0 : i32
    %c0_i32_1 = arith.constant 0 : i32
    return %c0_i32, %c0_i32_0 : i32, i32
  }
  func.func @transform_6(%arg0: i32) -> (i32, i32, i32) {
    %c0_i32 = arith.constant 0 : i32
    %c0_i32_0 = arith.constant 0 : i32
    %c0_i32_1 = arith.constant 0 : i32
    return %arg0, %c0_i32, %c0_i32_0 : i32, i32, i32
  }
}

</mosaic_0001>

<llo_original>
// kernel: tpu_custom_call.1
$region0: #{tpu_custom_call.1}
  #allocation0 [shape = 'u32[]', space=smem, size = 0x4, offset = 0x4, fixed_abs, tag = 'smem constant byte address 0x4 - core index']
  #allocation1 [shape = 'u32[144,128]{1,0:T(1,128)}', space=vmem, size = 0x12000, scoped, tag = 'internal scratch']
  #allocation2 [shape = 'f32[1,1]{1,0:T(1,128)S(6)}', space=smem, size = 0x200, scoped, tag = 'scoped memory for tpu_custom_call.1']
  %s0 = inlined_call_operand.vmem [shape: f32[2,8,16], index: 0, kind: input, shape index: {}]
  %s1 = inlined_call_operand.vmem [shape: f32[2,8,16], index: 1, kind: input, shape index: {}]
  %s2 = inlined_call_operand.vmem [shape: f32[2,8,16], index: 2, kind: input, shape index: {}]
  %s3 = inlined_call_operand.vmem [shape: f32[3,32,1], index: 3, kind: input, shape index: {}]
  %s4 = inlined_call_operand.vmem [shape: f32[1,128], index: 4, kind: input, shape index: {}]
  %s5 = inlined_call_operand.<no memory space> [shape: f32[1,1], index: 5, kind: input, shape index: {}]
  %s6 = inlined_call_operand.hbm [shape: f32[1,1,128], index: 6, kind: output, shape index: {}]
  %s7 = sld [smem:[#allocation0]]
  $region34: #{tpu_custom_call.1} parent=0
    _
  %s9 = ssub.s32 1, %s7
  %s10 = scalar_select 0, %s9, %s7
  %11 = sst [smem:[#allocation2]] %s5
  $region1: #{tpu_custom_call.1} parent=0
    #allocation3 [shape = 'u8[512]{0}', space=vmem, size = 0x400, scoped, tag = 'output window, operand 0, single buffered']
    #allocation4 [shape = 's32[1]{0}', space=sflag, size = 0x4, scoped, tag = 'scoped memory for tpu_custom_call.1']
    %12 = vsyncpa [#allocation4], 0
    // Predicated region
    $region2: #{tpu_custom_call.1} parent=1 // pred_check
      _
    $region3: #{tpu_custom_call.1} parent=1 // pred_check_branch
      %14 = sbr.rel (0) target = $region5
    $region4: #{tpu_custom_call.1} parent=1 // pred_region
      _
    $region5: #{tpu_custom_call.1} parent=1 // pred_fallthru
      _
    // Predicated region
    $region6: #{tpu_custom_call.1} parent=1 // pred_check
      _
    $region7: #{tpu_custom_call.1} parent=1 // pred_check_branch
      %16 = sbr.rel (0) target = $region9
    $region8: #{tpu_custom_call.1} parent=1 // pred_region
      _
    $region9: #{tpu_custom_call.1} parent=1 // pred_fallthru
      _
    // Predicated region
    $region10: #{tpu_custom_call.1} parent=1 // pred_check
      _
    $region11: #{tpu_custom_call.1} parent=1 // pred_check_branch
      %18 = sbr.rel (0) target = $region13
    $region12: #{tpu_custom_call.1} parent=1 // pred_region
      _
    $region13: #{tpu_custom_call.1} parent=1 // pred_fallthru
      _
    // Predicated region
    $region14: #{tpu_custom_call.1} parent=1 // pred_check
      _
    $region15: #{tpu_custom_call.1} parent=1 // pred_check_branch
      %20 = sbr.rel (0) target = $region17
    $region16: #{tpu_custom_call.1} parent=1 // pred_region
      _
    $region17: #{tpu_custom_call.1} parent=1 // pred_fallthru
      _
    // Predicated region
    $region18: #{tpu_custom_call.1} parent=1 // pred_check
      _
    $region19: #{tpu_custom_call.1} parent=1 // pred_check_branch
      %22 = sbr.rel (0) target = $region21
    $region20: #{tpu_custom_call.1} parent=1 // pred_region
      _
    $region21: #{tpu_custom_call.1} parent=1 // pred_fallthru
      _
    // Predicated region
    $region22: #{tpu_custom_call.1} parent=1 // pred_check
      _
    $region23: #{tpu_custom_call.1} parent=1 // pred_check_branch
      %24 = sbr.rel (0) target = $region25
    $region24: #{tpu_custom_call.1} parent=1 // pred_region
      _
    $region25: #{tpu_custom_call.1} parent=1 // pred_fallthru
      _
    %v25 = vld [vmem:[%s0] sm:$0xff]
    %v26 = vld [vmem:[%s0 + $0x8] sm:$0xff]
    %vm27 = vcmask 130048
    %v28 = vsel %vm27, %v25, 0.0
    %v29 = vrot.slane %v28, 4
    %v30 = vadd.f32 %v28, %v29
    %v31 = vrot.slane %v30, 2
    %v32 = vadd.f32 %v30, %v31
    %v33 = vrot.slane %v32, 1
    %v34 = vadd.f32 %v32, %v33
    %v35 = vsel %vm27, %v26, 0.0
    %v36 = vrot.slane %v35, 4
    %v37 = vadd.f32 %v35, %v36
    %v38 = vrot.slane %v37, 2
    %v39 = vadd.f32 %v37, %v38
    %v40 = vrot.slane %v39, 1
    %v41 = vadd.f32 %v39, %v40
    %v42 = vld [vmem:[%s1] sm:$0xff]
    %v43 = vld [vmem:[%s1 + $0x8] sm:$0xff]
    %v44 = vsel %vm27, %v42, 0.0
    %v45 = vrot.slane %v44, 4
    %v46 = vadd.f32 %v44, %v45
    %v47 = vrot.slane %v46, 2
    %v48 = vadd.f32 %v46, %v47
    %v49 = vrot.slane %v48, 1
    %v50 = vadd.f32 %v48, %v49
    %v51 = vsel %vm27, %v43, 0.0
    %v52 = vrot.slane %v51, 4
    %v53 = vadd.f32 %v51, %v52
    %v54 = vrot.slane %v53, 2
    %v55 = vadd.f32 %v53, %v54
    %v56 = vrot.slane %v55, 1
    %v57 = vadd.f32 %v55, %v56
    %v58 = vld [vmem:[%s2] sm:$0xff]
    %v59 = vld [vmem:[%s2 + $0x8] sm:$0xff]
    %v60 = vsel %vm27, %v58, 0.0
    %v61 = vrot.slane %v60, 4
    %v62 = vadd.f32 %v60, %v61
    %v63 = vrot.slane %v62, 2
    %v64 = vadd.f32 %v62, %v63
    %v65 = vrot.slane %v64, 1
    %v66 = vadd.f32 %v64, %v65
    %v67 = vsel %vm27, %v59, 0.0
    %v68 = vrot.slane %v67, 4
    %v69 = vadd.f32 %v67, %v68
    %v70 = vrot.slane %v69, 2
    %v71 = vadd.f32 %v69, %v70
    %v72 = vrot.slane %v71, 1
    %v73 = vadd.f32 %v71, %v72
    %75 = vrot.lane.b32.xlu0 %v50, 16
    %v76 = vpop.permute.xlu0 %75
    %79 = vrot.lane.b32.xlu0 %v41, 32
    %v80 = vpop.permute.xlu0 %79
    %83 = vrot.lane.b32.xlu0 %v57, 48
    %v84 = vpop.permute.xlu0 %83
    %87 = vrot.lane.b32.xlu0 %v34, 64
    %v88 = vpop.permute.xlu0 %87
    %91 = vrot.lane.b32.xlu0 %v66, 80
    %v92 = vpop.permute.xlu0 %91
    %94 = vrot.lane.b32.xlu0 %v41, 96
    %v95 = vpop.permute.xlu0 %94
    %98 = vrot.lane.b32.xlu0 %v73, 112
    %v99 = vpop.permute.xlu0 %98
    %v101 = vsel %vm27, %v34, %v76
    %vm102 = vcmask 261120
    %v103 = vsel %vm102, %v101, %v80
    %vm104 = vcmask 392192
    %v105 = vsel %vm104, %v103, %v84
    %vm106 = vcmask 523264
    %v107 = vsel %vm106, %v105, %v88
    %vm108 = vcmask 654336
    %v109 = vsel %vm108, %v107, %v92
    %vm110 = vcmask 785408
    %v111 = vsel %vm110, %v109, %v95
    %vm112 = vcmask 916480
    %v113 = vsel %vm112, %v111, %v99
    %v114 = vld [vmem:[%s3] sm:$0xff]
    %v115 = vld [vmem:[%s3 + $0x8] sm:$0xff]
    %v116 = vld [vmem:[%s3 + $0x10] sm:$0xff]
    %v117 = vld [vmem:[%s3 + $0x18] sm:$0xff]
    %s118 = scalar_lea.vmem %s3, 32
    %v119 = vld [vmem:[%s118] sm:$0xff]
    %v120 = vld [vmem:[%s118 + $0x8] sm:$0xff]
    %v121 = vld [vmem:[%s118 + $0x10] sm:$0xff]
    %v122 = vld [vmem:[%s118 + $0x18] sm:$0xff]
    %s123 = scalar_lea.vmem %s3, 64
    %v124 = vld [vmem:[%s123] sm:$0xff]
    %v125 = vld [vmem:[%s123 + $0x8] sm:$0xff]
    %v126 = vld [vmem:[%s123 + $0x10] sm:$0xff]
    %v127 = vld [vmem:[%s123 + $0x18] sm:$0xff]
    %v128 = vld [vmem:[%s4] sm:$0x1]
    %130 = vset.pattern.permute.xlu0 0
    %131 = vperm.xlu0 %130, %v114
    %v132 = vpop.permute.xlu0 %131
    %135 = vset.pattern.permute.xlu0 0
    %136 = vperm.xlu0 %135, %v115
    %v137 = vpop.permute.xlu0 %136
    %140 = vset.pattern.permute.xlu0 0
    %141 = vperm.xlu0 %140, %v116
    %v142 = vpop.permute.xlu0 %141
    %145 = vset.pattern.permute.xlu0 0
    %146 = vperm.xlu0 %145, %v117
    %v147 = vpop.permute.xlu0 %146
    %v149 = vlaneseq
    %v150 = vshrl.u32 %v149, 7
    %v151 = vsub.s32 0, %v150
    %v152 = vrot.slane %v113, %v151
    %v153 = vmul.f32 %v132, %v152
    %v154 = vmul.f32 %v137, %v152
    %v155 = vmul.f32 %v142, %v152
    %v156 = vmul.f32 %v147, %v152
    %158 = vset.pattern.permute.xlu0 0
    %159 = vperm.xlu0 %158, %v119
    %v160 = vpop.permute.xlu0 %159
    %163 = vset.pattern.permute.xlu0 0
    %164 = vperm.xlu0 %163, %v120
    %v165 = vpop.permute.xlu0 %164
    %168 = vset.pattern.permute.xlu0 0
    %169 = vperm.xlu0 %168, %v121
    %v170 = vpop.permute.xlu0 %169
    %173 = vset.pattern.permute.xlu0 0
    %174 = vperm.xlu0 %173, %v122
    %v175 = vpop.permute.xlu0 %174
    %v177 = vadd.f32 %v153, %v160
    %v178 = vadd.f32 %v154, %v165
    %v179 = vadd.f32 %v155, %v170
    %v180 = vadd.f32 %v156, %v175
    %vm181 = vcmp.ge.f32.partialorder %v177, 0.0
    %vm182 = vcmp.ge.f32.partialorder %v178, 0.0
    %vm183 = vcmp.ge.f32.partialorder %v179, 0.0
    %vm184 = vcmp.ge.f32.partialorder %v180, 0.0
    %v186 = vlaneseq
    %v187 = vshrl.u32 %v186, 7
    %v188 = vsub.s32 0, %v187
    %v189 = vrot.slane %v128, %v188
    %v191 = vmul.f32 %v189, %v177
    %v192 = vmul.f32 %v189, %v178
    %v193 = vmul.f32 %v189, %v179
    %v194 = vmul.f32 %v189, %v180
    %v195 = vsel %vm181, %v177, %v191
    %v196 = vsel %vm182, %v178, %v192
    %v197 = vsel %vm183, %v179, %v193
    %v198 = vsel %vm184, %v180, %v194
    %200 = vset.pattern.permute.xlu0 0
    %201 = vperm.xlu0 %200, %v124
    %v202 = vpop.permute.xlu0 %201
    %205 = vset.pattern.permute.xlu0 0
    %206 = vperm.xlu0 %205, %v125
    %v207 = vpop.permute.xlu0 %206
    %210 = vset.pattern.permute.xlu0 0
    %211 = vperm.xlu0 %210, %v126
    %v212 = vpop.permute.xlu0 %211
    %215 = vset.pattern.permute.xlu0 0
    %216 = vperm.xlu0 %215, %v127
    %v217 = vpop.permute.xlu0 %216
    %v219 = vmul.f32 %v202, %v195
    %v220 = vmul.f32 %v207, %v196
    %v221 = vmul.f32 %v212, %v197
    %v222 = vmul.f32 %v217, %v198
    %v223 = vadd.f32 %v219, %v220
    %v224 = vadd.f32 %v223, %v221
    %v225 = vadd.f32 %v224, %v222
    %v226 = vrot.slane %v225, 4
    %v227 = vadd.f32 %v225, %v226
    %v228 = vrot.slane %v227, 2
    %v229 = vadd.f32 %v227, %v228
    %v230 = vrot.slane %v229, 1
    %v231 = vadd.f32 %v229, %v230
    %s232 = sld [smem:[#allocation2]]
    %v233 = vstv %s232
    %v234 = vadd.f32 %v231, %v233
    %235 = vst [vmem:[#allocation3] sm:$0x1] %v234
    // Predicated region
    $region26: #{tpu_custom_call.1} parent=1 // pred_check
      _
    $region27: #{tpu_custom_call.1} parent=1 // pred_check_branch
      %237 = sbr.rel (0) target = $region29
    $region28: #{tpu_custom_call.1} parent=1 // pred_region
      %s239 = ssub.s32 16, 16
      %240 = vsyncadd [#allocation4], %s239
      %s242 = sshll.u32 [#allocation3], 4
      %s243 = int_to_ptr.vmem [resolvable:$true] %s242
      %245 = dma.vmem_to_hbm [thread:$0]  %s243, 16, %s6, [#allocation4]
    $region29: #{tpu_custom_call.1} parent=1 // pred_fallthru
      _
    // Predicated region
    $region30: #{tpu_custom_call.1} parent=1 // pred_check
      _
    $region31: #{tpu_custom_call.1} parent=1 // pred_check_branch
      %247 = sbr.rel (0) target = $region33
    $region32: #{tpu_custom_call.1} parent=1 // pred_region
      %248 = dma.done [#allocation4], 16
    $region33: #{tpu_custom_call.1} parent=1 // pred_fallthru
      _
    %249 = vsyncpa [#allocation4], 1

</llo_original>
